<compile_context>
chip_gen: v6e
topology: v6e:2x2x1
jax: 0.10.0
libtpu: 0.0.40
codegen_flags: <defaults>
</compile_context>

<pallas_src>
import functools

import jax
import jax.numpy as jnp
from jax import lax
from jax.experimental import pallas as pl
from jax.experimental.pallas import tpu as pltpu

LANES = 128           # lane width (fixed by hardware)
TILE_ROWS_F32 = 4096  # sublane rows per tile for 4-byte inputs (2 MiB/tile)


def _default_num_parts() -> int:
    """2 on dual-TensorCore chips (v4/v5p megacore, v7x), 1 on v5e/v6e."""
    try:
        kind = jax.devices()[0].device_kind.lower()
    except Exception:
        return 1
    if "lite" in kind or "v5e" in kind or "v6e" in kind:
        return 1
    # TODO(synk): verify on v7x that the 'parallel' axis actually shards one
    # partition per TensorCore (trace check); if not, switch axis 0 to
    # pltpu.CORE_PARALLEL / a core_map mesh.
    return 2


def _smape_kernel(pred_ref, true_ref, out_ref, *, tile_rows, steps_per_part, rows):
    """Grid = (partition [parallel], step-within-partition [arbitrary])."""
    part = pl.program_id(0)
    j = pl.program_id(1)

    # Output block is resident across the arbitrary axis (its index_map ignores
    # j) -> standard init/accumulate pattern, no scratch needed.
    @pl.when(j == 0)
    def _():
        out_ref[...] = jnp.zeros_like(out_ref)

    x = pred_ref[...].astype(jnp.float32)
    t = true_ref[...].astype(jnp.float32)
    num = 100.0 * jnp.abs(x - t)
    den = jnp.abs(x) + jnp.abs(t) + jnp.float32(1e-8)

    # EUP reciprocal seed + two Newton-Raphson refinements: relative error
    # ~seed_err^4 (< 1e-9 even from an 8-bit seed), far inside 1e-5 tolerance,
    # while keeping the expensive part of the divide off the VPU slots.
    inv = pl.reciprocal(den, approx=True)
    inv = inv * (2.0 - den * inv)
    inv = inv * (2.0 - den * inv)
    term = num * inv

    # UN-clamped start row of this grid step.  Only the final partial block of
    # the data (and a fully out-of-range clamped padding step of the last
    # partition, whose base_row >= rows) can overrun, so the per-element row
    # mask is gated off the hot path.
    base_row = (part * steps_per_part + j) * tile_rows
    needs_mask = base_row + tile_rows > rows

    @pl.when(jnp.logical_not(needs_mask))
    def _():
        out_ref[0:1, :] += jnp.sum(term, axis=0, keepdims=True)

    @pl.when(needs_mask)
    def _():
        row_ids = base_row + lax.broadcasted_iota(jnp.int32, (tile_rows, LANES), 0)
        # jnp.where is a select: garbage rows (undefined overhang data or the
        # re-read clamped block) contribute exactly 0 and cannot leak NaN/Inf.
        masked = jnp.where(row_ids < rows, term, 0.0)
        out_ref[0:1, :] += jnp.sum(masked, axis=0, keepdims=True)


def smape(pred: jax.Array, true: jax.Array) -> jax.Array:
    assert pred.shape == true.shape, (pred.shape, true.shape)
    n = pred.size

    p_flat = pred.reshape(-1)   # free view for contiguous arrays
    t_flat = true.reshape(-1)
    rows = n // LANES
    n_main = rows * LANES       # 128-aligned prefix handled by the kernel

    total = jnp.float32(0.0)

    if rows > 0:
        p2 = (p_flat if n_main == n else p_flat[:n_main]).reshape(rows, LANES)
        t2 = (t_flat if n_main == n else t_flat[:n_main]).reshape(rows, LANES)

        # bf16/f16 inputs: double the rows for the same VMEM byte footprint.
        itembytes = max(p2.dtype.itemsize, t2.dtype.itemsize)
        base_rows = TILE_ROWS_F32 * max(1, 4 // itembytes)
        tile_rows = rows if rows <= base_rows else base_rows  # full dim or 8-aligned
        nblocks = pl.cdiv(rows, tile_rows)
        num_parts = min(_default_num_parts(), nblocks)
        steps_per_part = pl.cdiv(nblocks, num_parts)

        def in_map(part, j):
            # Clamp so (rare) padding steps of the last partition stay in
            # bounds; their contribution is masked to zero inside the kernel
            # (the mask uses the UN-clamped base_row).
            return (jnp.minimum(part * steps_per_part + j, nblocks - 1), 0)

        kernel = functools.partial(
            _smape_kernel,
            tile_rows=tile_rows,
            steps_per_part=steps_per_part,
            rows=rows,
        )

        # 2 inputs x 2 pipeline buffers x tile bytes, plus headroom.
        vmem_limit = int(
            min(max(4 * tile_rows * LANES * itembytes + (4 << 20), 16 << 20), 64 << 20)
        )

        # Output: one (8, 128) f32 block per partition (8-sublane block keeps
        # the layout trivially legal); only sublane row 0 carries the partial
        # lane sums, the rest stay zero.
        partials = pl.pallas_call(
            kernel,
            out_shape=jax.ShapeDtypeStruct((num_parts * 8, LANES), jnp.float32),
            grid_spec=pltpu.PrefetchScalarGridSpec(
                num_scalar_prefetch=0,
                grid=(num_parts, steps_per_part),
                in_specs=[
                    pl.BlockSpec((tile_rows, LANES), in_map),
                    pl.BlockSpec((tile_rows, LANES), in_map),
                ],
                out_specs=pl.BlockSpec((8, LANES), lambda part, j: (part, 0)),
            ),
            compiler_params=pltpu.CompilerParams(
                dimension_semantics=("parallel", "arbitrary"),
                vmem_limit_bytes=vmem_limit,
            ),
        )(p2, t2)

        # Single tiny cross-lane / cross-partition reduce.
        total = jnp.sum(partials)

    if n_main < n:
        # <=127-element ragged tail: fold in with a tiny jnp expression instead
        # of jnp.pad-ing (and re-copying) the full inputs.
        pt = p_flat[n_main:].astype(jnp.float32)
        tt = t_flat[n_main:].astype(jnp.float32)
        total = total + jnp.sum(
            100.0 * jnp.abs(pt - tt) / (jnp.abs(pt) + jnp.abs(tt) + jnp.float32(1e-8))
        )

    return total / n


def _reference(pred, true):
    return jnp.mean(
        100.0 * jnp.abs(pred - true) / (jnp.abs(pred) + jnp.abs(true) + 1e-8)
    )


if __name__ == "__main__":
    key = jax.random.PRNGKey(0)
    k1, k2, k3, k4, k5, k6 = jax.random.split(key, 6)

    # Small shape consistent with an imputation loss call: (batch, C, H, W).
    pred = jax.random.normal(k1, (2, 4, 16, 16), dtype=jnp.float32)
    true = jax.random.normal(k2, (2, 4, 16, 16), dtype=jnp.float32)
    loss = jax.block_until_ready(smape(pred, true))
    ref = _reference(pred, true)
    assert jnp.allclose(loss, ref, rtol=1e-5, atol=1e-5), (loss, ref)

    # Ragged path (n % 128 != 0): aligned-prefix kernel + tiny jnp tail fold.
    pred2 = jax.random.normal(k3, (2, 33, 4001), dtype=jnp.float32)
    true2 = jax.random.normal(k4, (2, 33, 4001), dtype=jnp.float32)
    loss2 = jax.block_until_ready(smape(pred2, true2))
    ref2 = _reference(pred2, true2)
    assert jnp.allclose(loss2, ref2, rtol=1e-4, atol=1e-3), (loss2, ref2)

    # Multi-block path: rows = 8704 -> 3 blocks of 4096 rows, exercising the
    # masked final block and (on dual-TC chips) a clamped padding grid step.
    pred3 = jax.random.normal(k5, (64, 1024, 17), dtype=jnp.float32)
    true3 = jax.random.normal(k6, (64, 1024, 17), dtype=jnp.float32)
    loss3 = jax.block_until_ready(smape(pred3, true3))
    ref3 = _reference(pred3, true3)
    assert jnp.allclose(loss3, ref3, rtol=1e-4, atol=1e-3), (loss3, ref3)

    print("KERNEL_OK")
</pallas_src>

<mosaic_0001>
module attributes {stable_mosaic.version = 11 : i64} {
  func.func @_smape_kernel(%arg0: i32, %arg1: i32, %arg2: memref<16x128xf32, #tpu.memory_space<vmem>>, %arg3: memref<16x128xf32, #tpu.memory_space<vmem>>, %arg4: memref<8x128xf32, #tpu.memory_space<vmem>>) attributes {dimension_semantics = [#tpu.dimension_semantics<parallel>, #tpu.dimension_semantics<arbitrary>], iteration_bounds = array<i64: 1, 1>, scalar_prefetch = 0 : i64, scratch_operands = 0 : i64, tpu.core_type = #tpu.core_type<tc>, window_params = [{transform_indices = @transform_0, window_bounds = array<i64: 16, 128>}, {transform_indices = @transform_1, window_bounds = array<i64: 16, 128>}, {transform_indices = @transform_2, window_bounds = array<i64: 8, 128>}]} {
    %c0_i32 = arith.constant 0 : i32
    %0 = arith.cmpi eq, %arg1, %c0_i32 : i32
    %1 = arith.extui %0 : i1 to i32
    %c0_i32_0 = arith.constant 0 : i32
    %2 = arith.cmpi ne, %1, %c0_i32_0 : i32
    scf.if %2 {
      %cst_11 = arith.constant 0.000000e+00 : f32
      %34 = vector.broadcast %cst_11 : f32 to vector<8x128xf32>
      %c0_12 = arith.constant 0 : index
      %c0_13 = arith.constant 0 : index
      %35 = vector.load %arg4[%c0_12, %c0_13] : memref<8x128xf32, #tpu.memory_space<vmem>>, vector<8x128xf32>
      tpu.vector_store %arg4[%c0_12, %c0_13], %34 {strides = array<i32>} : memref<8x128xf32, #tpu.memory_space<vmem>>, vector<8x128xf32>,
    } else {
    }
    %c0 = arith.constant 0 : index
    %c0_1 = arith.constant 0 : index
    %3 = vector.load %arg2[%c0, %c0_1] : memref<16x128xf32, #tpu.memory_space<vmem>>, vector<16x128xf32>
    %c0_2 = arith.constant 0 : index
    %c0_3 = arith.constant 0 : index
    %4 = vector.load %arg3[%c0_2, %c0_3] : memref<16x128xf32, #tpu.memory_space<vmem>>, vector<16x128xf32>
    %5 = arith.subf %3, %4 : vector<16x128xf32>
    %6 = math.absf %5 : vector<16x128xf32>
    %cst = arith.constant 1.000000e+02 : f32
    %7 = vector.broadcast %cst : f32 to vector<16x128xf32>
    %8 = arith.mulf %7, %6 : vector<16x128xf32>
    %9 = math.absf %3 : vector<16x128xf32>
    %10 = math.absf %4 : vector<16x128xf32>
    %11 = arith.addf %9, %10 : vector<16x128xf32>
    %cst_4 = arith.constant 9.99999993E-9 : f32
    %12 = vector.broadcast %cst_4 : f32 to vector<16x128xf32>
    %13 = arith.addf %11, %12 : vector<16x128xf32>
    %14 = tpu.reciprocal %13 {approx = true} : vector<16x128xf32> -> vector<16x128xf32>
    %15 = arith.mulf %13, %14 : vector<16x128xf32>
    %cst_5 = arith.constant 2.000000e+00 : f32
    %16 = vector.broadcast %cst_5 : f32 to vector<16x128xf32>
    %17 = arith.subf %16, %15 : vector<16x128xf32>
    %18 = arith.mulf %14, %17 : vector<16x128xf32>
    %19 = arith.mulf %13, %18 : vector<16x128xf32>
    %cst_6 = arith.constant 2.000000e+00 : f32
    %20 = vector.broadcast %cst_6 : f32 to vector<16x128xf32>
    %21 = arith.subf %20, %19 : vector<16x128xf32>
    %22 = arith.mulf %18, %21 : vector<16x128xf32>
    %23 = arith.mulf %8, %22 : vector<16x128xf32>
    %c1_i32 = arith.constant 1 : i32
    %24 = arith.muli %arg0, %c1_i32 : i32
    %25 = arith.addi %24, %arg1 : i32
    %c16_i32 = arith.constant 16 : i32
    %26 = arith.muli %25, %c16_i32 : i32
    %c16_i32_7 = arith.constant 16 : i32
    %27 = arith.addi %26, %c16_i32_7 : i32
    %c16_i32_8 = arith.constant 16 : i32
    %28 = arith.cmpi sgt, %27, %c16_i32_8 : i32
    %true = arith.constant true
    %29 = arith.xori %28, %true : i1
    %30 = arith.extui %29 : i1 to i32
    %c0_i32_9 = arith.constant 0 : i32
    %31 = arith.cmpi ne, %30, %c0_i32_9 : i32
    scf.if %31 {
      %c0_11 = arith.constant 0 : index
      %c0_12 = arith.constant 0 : index
      %34 = vector.load %arg4[%c0_11, %c0_12] : memref<8x128xf32, #tpu.memory_space<vmem>>, vector<1x128xf32>
      %cst_13 = arith.constant dense<0.000000e+00> : vector<128xf32>
      %35 = vector.multi_reduction <add>, %23, %cst_13 [0] : vector<16x128xf32> to vector<128xf32>
      %36 = vector.shape_cast %35 : vector<128xf32> to vector<1x128xf32>
      %37 = arith.addf %34, %36 : vector<1x128xf32>
      %c0_14 = arith.constant 0 : index
      %c0_15 = arith.constant 0 : index
      %38 = vector.load %arg4[%c0_14, %c0_15] : memref<8x128xf32, #tpu.memory_space<vmem>>, vector<1x128xf32>
      tpu.vector_store %arg4[%c0_14, %c0_15], %37 {strides = array<i32>} : memref<8x128xf32, #tpu.memory_space<vmem>>, vector<1x128xf32>,
    } else {
    }
    %32 = arith.extui %28 : i1 to i32
    %c0_i32_10 = arith.constant 0 : i32
    %33 = arith.cmpi ne, %32, %c0_i32_10 : i32
    scf.if %33 {
      %34 = tpu.iota {dimensions = array<i32: 0>} : vector<16x128xi32>
      %35 = vector.broadcast %26 : i32 to vector<16x128xi32>
      %36 = arith.addi %35, %34 : vector<16x128xi32>
      %c16_i32_11 = arith.constant 16 : i32
      %37 = vector.broadcast %c16_i32_11 : i32 to vector<16x128xi32>
      %38 = arith.cmpi slt, %36, %37 : vector<16x128xi32>
      %cst_12 = arith.constant 0.000000e+00 : f32
      %39 = vector.broadcast %cst_12 : f32 to vector<16x128xf32>
      %40 = arith.select %38, %23, %39 : vector<16x128xi1>, vector<16x128xf32>
      %c0_13 = arith.constant 0 : index
      %c0_14 = arith.constant 0 : index
      %41 = vector.load %arg4[%c0_13, %c0_14] : memref<8x128xf32, #tpu.memory_space<vmem>>, vector<1x128xf32>
      %cst_15 = arith.constant dense<0.000000e+00> : vector<128xf32>
      %42 = vector.multi_reduction <add>, %40, %cst_15 [0] : vector<16x128xf32> to vector<128xf32>
      %43 = vector.shape_cast %42 : vector<128xf32> to vector<1x128xf32>
      %44 = arith.addf %41, %43 : vector<1x128xf32>
      %c0_16 = arith.constant 0 : index
      %c0_17 = arith.constant 0 : index
      %45 = vector.load %arg4[%c0_16, %c0_17] : memref<8x128xf32, #tpu.memory_space<vmem>>, vector<1x128xf32>
      tpu.vector_store %arg4[%c0_16, %c0_17], %44 {strides = array<i32>} : memref<8x128xf32, #tpu.memory_space<vmem>>, vector<1x128xf32>,
    } else {
    }
    return
  }
  func.func @transform_0(%arg0: i32, %arg1: i32) -> (i32, i32) {
    %c1_i32 = arith.constant 1 : i32
    %0 = arith.muli %arg0, %c1_i32 : i32
    %1 = arith.addi %0, %arg1 : i32
    %c0_i32 = arith.constant 0 : i32
    %2 = arith.minsi %1, %c0_i32 : i32
    %c0_i32_0 = arith.constant 0 : i32
    %c0_i32_1 = arith.constant 0 : i32
    return %2, %c0_i32_0 : i32, i32
  }
  func.func @transform_1(%arg0: i32, %arg1: i32) -> (i32, i32) {
    %c1_i32 = arith.constant 1 : i32
    %0 = arith.muli %arg0, %c1_i32 : i32
    %1 = arith.addi %0, %arg1 : i32
    %c0_i32 = arith.constant 0 : i32
    %2 = arith.minsi %1, %c0_i32 : i32
    %c0_i32_0 = arith.constant 0 : i32
    %c0_i32_1 = arith.constant 0 : i32
    return %2, %c0_i32_0 : i32, i32
  }
  func.func @transform_2(%arg0: i32, %arg1: i32) -> (i32, i32) {
    %c0_i32 = arith.constant 0 : i32
    %c0_i32_0 = arith.constant 0 : i32
    return %arg0, %c0_i32 : i32, i32
  }
}

</mosaic_0001>

<llo_original>
// kernel: tpu_custom_call.1
$region0: #{tpu_custom_call.1}
  #allocation0 [shape = 'u32[]', space=smem, size = 0x4, offset = 0x4, fixed_abs, tag = 'smem constant byte address 0x4 - core index']
  #allocation1 [shape = 'u32[144,128]{1,0:T(1,128)}', space=vmem, size = 0x12000, scoped, tag = 'internal scratch']
  %s0 = inlined_call_operand.hbm [shape: f32[16,128], index: 0, kind: input, shape index: {}]
  %s1 = inlined_call_operand.hbm [shape: f32[16,128], index: 1, kind: input, shape index: {}]
  %s2 = inlined_call_operand.hbm [shape: f32[8,128], index: 2, kind: output, shape index: {}]
  %s3 = sld [smem:[#allocation0]]
  $region38: #{tpu_custom_call.1} parent=0
    _
  %s5 = ssub.s32 1, %s3
  %s6 = scalar_select 0, %s5, %s3
  $region1: #{tpu_custom_call.1} parent=0
    #allocation2 [shape = 'u8[8192]{0}', space=vmem, size = 0x2000, scoped, tag = 'input window, operand 0, single buffered']
    #allocation3 [shape = 's32[1]{0}', space=sflag, size = 0x4, scoped, tag = 'scoped memory for tpu_custom_call.1']
    #allocation4 [shape = 's32[1]{0}', space=sflag, size = 0x4, scoped, tag = 'scoped memory for tpu_custom_call.1']
    #allocation5 [shape = 'u8[8192]{0}', space=vmem, size = 0x2000, scoped, tag = 'input window, operand 1, single buffered']
    #allocation6 [shape = 's32[1]{0}', space=sflag, size = 0x4, scoped, tag = 'scoped memory for tpu_custom_call.1']
    #allocation7 [shape = 'u8[4096]{0}', space=vmem, size = 0x1000, scoped, tag = 'output window, operand 0, single buffered']
    %7 = vsyncpa [#allocation3], 0
    %8 = vsyncpa [#allocation6], 0
    %9 = vsyncpa [#allocation4], 0
    // Predicated region
    $region2: #{tpu_custom_call.1} parent=1 // pred_check
      _
    $region3: #{tpu_custom_call.1} parent=1 // pred_check_branch
      %11 = sbr.rel (0) target = $region5
    $region4: #{tpu_custom_call.1} parent=1 // pred_region
      %s12 = sadd.s32 0, 0
      %p13 = scmp.lt.s32.totalorder %s12, 0
      %s14 = scalar_select %p13, %s12, 0
      %s15 = smul.u32 2, %s14
      %s17 = ssub.s32 256, 256
      %18 = vsyncadd [#allocation3], %s17
      %s19 = smul.addr %s15, 128
      %s20 = scalar_lea.hbm %s0, %s19
      %s21 = sshll.u32 [#allocation2], 4
      %s22 = int_to_ptr.vmem [resolvable:$true] %s21
      %27 = dma.hbm_to_vmem [thread:$0]  %s20, 256, %s22, [#allocation3], 128, 128, 8
    $region5: #{tpu_custom_call.1} parent=1 // pred_fallthru
      _
    // Predicated region
    $region6: #{tpu_custom_call.1} parent=1 // pred_check
      _
    $region7: #{tpu_custom_call.1} parent=1 // pred_check_branch
      %29 = sbr.rel (0) target = $region9
    $region8: #{tpu_custom_call.1} parent=1 // pred_region
      %s30 = sadd.s32 0, 0
      %p31 = scmp.lt.s32.totalorder %s30, 0
      %s32 = scalar_select %p31, %s30, 0
      %s33 = smul.u32 2, %s32
      %s35 = ssub.s32 256, 256
      %36 = vsyncadd [#allocation6], %s35
      %s37 = smul.addr %s33, 128
      %s38 = scalar_lea.hbm %s1, %s37
      %s39 = sshll.u32 [#allocation5], 4
      %s40 = int_to_ptr.vmem [resolvable:$true] %s39
      %45 = dma.hbm_to_vmem [thread:$0]  %s38, 256, %s40, [#allocation6], 128, 128, 8
    $region9: #{tpu_custom_call.1} parent=1 // pred_fallthru
      _
    // Predicated region
    $region10: #{tpu_custom_call.1} parent=1 // pred_check
      _
    $region11: #{tpu_custom_call.1} parent=1 // pred_check_branch
      %47 = sbr.rel (0) target = $region13
    $region12: #{tpu_custom_call.1} parent=1 // pred_region
      %48 = dma.done [#allocation3], 256
    $region13: #{tpu_custom_call.1} parent=1 // pred_fallthru
      _
    // Predicated region
    $region14: #{tpu_custom_call.1} parent=1 // pred_check
      _
    $region15: #{tpu_custom_call.1} parent=1 // pred_check_branch
      %50 = sbr.rel (0) target = $region17
    $region16: #{tpu_custom_call.1} parent=1 // pred_region
      %51 = dma.done [#allocation6], 256
    $region17: #{tpu_custom_call.1} parent=1 // pred_fallthru
      _
    %s52 = sadd.s32 0, 0
    %p53 = scmp.lt.s32.totalorder %s52, 0
    %s54 = scalar_select %p53, %s52, 0
    %s55 = smul.u32 2, %s54
    %s56 = sadd.s32 0, 0
    %p57 = scmp.lt.s32.totalorder %s56, 0
    %s58 = scalar_select %p57, %s56, 0
    %s59 = smul.u32 2, %s58
    %p60 = scmp.eq.s32.totalorder 0, 0
    // Predicated region
    $region18: #{tpu_custom_call.1} parent=1 // pred_check
      %p61 = pneg %p60
    $region19: #{tpu_custom_call.1} parent=1 // pred_check_branch
      %63 = sbr.rel (%p61) target = $region21
    $region20: #{tpu_custom_call.1} parent=1 // pred_region
      %64 = vst [vmem:[#allocation7] sm:$0xff] 0.0
    $region21: #{tpu_custom_call.1} parent=1 // pred_fallthru
      _
    %v65 = vld [vmem:[#allocation2] sm:$0xff]
    %v66 = vld [vmem:[#allocation2 + $0x8] sm:$0xff]
    %v67 = vld [vmem:[#allocation5] sm:$0xff]
    %v68 = vld [vmem:[#allocation5 + $0x8] sm:$0xff]
    %v69 = vsub.f32 %v65, %v67
    %v70 = vsub.f32 %v66, %v68
    %v71 = vand.u32 2147483647, %v69
    %v72 = vand.u32 2147483647, %v70
    %v73 = vmul.f32 %v71, 100.0
    %v74 = vmul.f32 %v72, 100.0
    %v75 = vand.u32 2147483647, %v65
    %v76 = vand.u32 2147483647, %v66
    %v77 = vand.u32 2147483647, %v67
    %v78 = vand.u32 2147483647, %v68
    %v79 = vadd.f32 %v75, %v77
    %v80 = vadd.f32 %v76, %v78
    %v81 = vadd.f32 %v79, 1e-08
    %v82 = vadd.f32 %v80, 1e-08
    %v83 = vrcp.pop %v81
    %v84 = vrcp.pop %v82
    %v85 = vmul.f32 %v81, %v83
    %v86 = vmul.f32 %v82, %v84
    %v87 = vsub.f32 2.0, %v85
    %v88 = vsub.f32 2.0, %v86
    %v89 = vmul.f32 %v83, %v87
    %v90 = vmul.f32 %v84, %v88
    %v91 = vmul.f32 %v81, %v89
    %v92 = vmul.f32 %v82, %v90
    %v93 = vsub.f32 2.0, %v91
    %v94 = vsub.f32 2.0, %v92
    %v95 = vmul.f32 %v89, %v93
    %v96 = vmul.f32 %v90, %v94
    %v97 = vmul.f32 %v73, %v95
    %v98 = vmul.f32 %v74, %v96
    %s99 = sadd.s32 0, 0
    %s100 = smul.u32 %s99, 16
    %s101 = sadd.s32 %s100, 16
    %p102 = scmp.gt.s32.totalorder %s101, 16
    %p103 = scmp.le.s32.totalorder %s101, 16
    // Predicated region
    $region22: #{tpu_custom_call.1} parent=1 // pred_check
      %p104 = pneg %p103
    $region23: #{tpu_custom_call.1} parent=1 // pred_check_branch
      %106 = sbr.rel (%p104) target = $region25
    $region24: #{tpu_custom_call.1} parent=1 // pred_region
      %v107 = vld [vmem:[#allocation7] sm:$0x1]
      %v108 = vadd.f32 %v97, %v98
      %v109 = vrot.slane %v108, 4
      %v110 = vadd.f32 %v108, %v109
      %v111 = vrot.slane %v110, 2
      %v112 = vadd.f32 %v110, %v111
      %v113 = vrot.slane %v112, 1
      %v114 = vadd.f32 %v112, %v113
      %v115 = vadd.f32 %v107, %v114
      %116 = vst [vmem:[#allocation7] sm:$0x1] %v115
    $region25: #{tpu_custom_call.1} parent=1 // pred_fallthru
      _
    // Predicated region
    $region26: #{tpu_custom_call.1} parent=1 // pred_check
      %p117 = pneg %p102
    $region27: #{tpu_custom_call.1} parent=1 // pred_check_branch
      %119 = sbr.rel (%p117) target = $region29
    $region28: #{tpu_custom_call.1} parent=1 // pred_region
      %v120 = vlaneseq
      %v121 = vshrl.u32 %v120, 7
      %v122 = vadd.s32 %v121, 8
      %v123 = vstv %s100
      %v124 = vadd.s32 %v123, %v121
      %v125 = vadd.s32 %v123, %v122
      %vm126 = vcmp.lt.s32.totalorder %v124, 16
      %vm127 = vcmp.lt.s32.totalorder %v125, 16
      %v128 = vsel %vm126, %v97, 0.0
      %v129 = vsel %vm127, %v98, 0.0
      %v130 = vld [vmem:[#allocation7] sm:$0x1]
      %v131 = vadd.f32 %v128, %v129
      %v132 = vrot.slane %v131, 4
      %v133 = vadd.f32 %v131, %v132
      %v134 = vrot.slane %v133, 2
      %v135 = vadd.f32 %v133, %v134
      %v136 = vrot.slane %v135, 1
      %v137 = vadd.f32 %v135, %v136
      %v138 = vadd.f32 %v130, %v137
      %139 = vst [vmem:[#allocation7] sm:$0x1] %v138
    $region29: #{tpu_custom_call.1} parent=1 // pred_fallthru
      _
    // Predicated region
    $region30: #{tpu_custom_call.1} parent=1 // pred_check
      _
    $region31: #{tpu_custom_call.1} parent=1 // pred_check_branch
      %141 = sbr.rel (0) target = $region33
    $region32: #{tpu_custom_call.1} parent=1 // pred_region
      %s143 = ssub.s32 128, 128
      %144 = vsyncadd [#allocation4], %s143
      %s146 = sshll.u32 [#allocation7], 4
      %s147 = int_to_ptr.vmem [resolvable:$true] %s146
      %149 = dma.vmem_to_hbm [thread:$0]  %s147, 128, %s2, [#allocation4]
    $region33: #{tpu_custom_call.1} parent=1 // pred_fallthru
      _
    // Predicated region
    $region34: #{tpu_custom_call.1} parent=1 // pred_check
      _
    $region35: #{tpu_custom_call.1} parent=1 // pred_check_branch
      %151 = sbr.rel (0) target = $region37
    $region36: #{tpu_custom_call.1} parent=1 // pred_region
      %152 = dma.done [#allocation4], 128
    $region37: #{tpu_custom_call.1} parent=1 // pred_fallthru
      _
    %153 = vsyncpa [#allocation3], 1
    %154 = vsyncpa [#allocation6], 1
    %155 = vsyncpa [#allocation4], 1

</llo_original>
